<compile_context>
chip_gen: v5e
topology: v5e:2x2
jax: 0.10.0
libtpu: 0.0.40
codegen_flags: <defaults>
</compile_context>

<pallas_src>
import functools

import jax
import jax.numpy as jnp
from jax.experimental import pallas as pl
from jax.experimental.pallas import tpu as pltpu

_LANES = 128


def _gumbel_connector_kernel(inv_t_ref, logits_ref, *out_refs, hard,
                             return_max_id):
    """Fused scaled-softmax / argmax / one-hot over the last axis.

    inv_t_ref  : SMEM scalar (1,) f32  -- 1 / temperature
    logits_ref : VMEM tile (tb, Cp)
    out_refs   : (y_ref,) or (y_ref, idx_ref) depending on return_max_id
                 (idx_ref is a lane-dense (tb, 128) int32 block)
    """
    y_ref = out_refs[0]
    idx_ref = out_refs[1] if return_max_id else None

    # scaled logits: single VALU multiply per element (no f32 divide per elem)
    scaled = logits_ref[...].astype(jnp.float32) * inv_t_ref[0]

    # row max (one XLU reduction, reused by both softmax and argmax)
    m = jnp.max(scaled, axis=-1, keepdims=True)

    need_idx = hard or return_max_id
    if need_idx:
        # argmax along last dim, first occurrence on ties (matches torch.max);
        # softmax is monotone so argmax(scaled) == argmax(softmax(scaled)).
        n_class = scaled.shape[-1]
        col = jax.lax.broadcasted_iota(jnp.int32, scaled.shape, 1)
        is_max = scaled == m
        idx = jnp.min(jnp.where(is_max, col, n_class), axis=-1, keepdims=True)
        if return_max_id:
            # lane-dense store; wrapper slices [:, :1]
            idx_ref[...] = jnp.broadcast_to(idx, idx_ref.shape).astype(jnp.int32)

    if hard:
        # hard path: one-hot of the argmax; no exp / sum / divide needed
        y = (col == idx).astype(jnp.float32)
    else:
        # numerically-stable softmax; exact divide (kernel is HBM-bound, the
        # divide is off the critical path, and it keeps 1e-5 parity w/ torch)
        e = jnp.exp(scaled - m)
        denom = jnp.sum(e, axis=-1, keepdims=True)
        y = e / denom

    y_ref[...] = y.astype(y_ref.dtype)


def _vmem_config():
    """(vmem_limit_bytes to request, budget for tile sizing)."""
    phys = 64 * 1024 * 1024  # conservative fallback (v7x per-TC VMEM)
    try:
        info = pltpu.get_tpu_info()
        phys = int(getattr(info, "vmem_capacity_bytes", phys) or phys)
    except Exception:
        pass
    # half of physical VMEM as scoped limit (>= 32 MiB, <= 96 MiB),
    # and half of that as the tile-sizing budget for extra headroom.
    limit = min(max(32 * 1024 * 1024, phys // 2), 96 * 1024 * 1024)
    budget = limit // 2
    return limit, budget


def _pick_tb(B, Cp, budget):
    """Batch tile: multiple of 8, fits the budget (including the in-kernel
    intermediates), and keeps the grid at >=4 steps when B allows so both
    v7x TensorCores get work and double-buffering stays live."""
    # per-row bytes: double-buffered in + out f32 tiles (2 * 2 * Cp * 4)
    # plus ~4 live (tb, Cp) 32-bit intermediates in the body
    # (scaled, exp/one-hot, iota, mask).
    per_row = (2 * 2 + 4) * max(Cp, _LANES) * 4
    cap = max(8, (budget // per_row) // 8 * 8)
    target = ((max(8, -(-B // 4)) + 7) // 8) * 8      # ~B/4 rows, rounded to 8
    tb = min(cap, target)
    if tb >= B:
        return B          # full-array block (always a legal block shape)
    return tb             # multiple of 8; batch gets padded to a multiple


@functools.partial(jax.jit, static_argnames=("hard", "return_max_id"))
def gumbel_connector_forward(logits, temperature=1.0, hard=False,
                             return_max_id=False):
    """JAX/Pallas equivalent of GumbelConnector.forward."""
    B, C = logits.shape
    vmem_limit, budget = _vmem_config()

    # Pad the class dim to a lane-dense multiple of 128 (only for C >= 128);
    # -inf padding is exact for max / exp / sum / argmax.
    if C >= _LANES and C % _LANES != 0:
        Cp = ((C + _LANES - 1) // _LANES) * _LANES
    else:
        Cp = C

    tb = _pick_tb(B, Cp, budget)
    Bp = -(-B // tb) * tb  # pad batch so the grid tiles evenly

    x = logits
    if Cp != C:
        x = jnp.pad(x, ((0, 0), (0, Cp - C)), constant_values=-jnp.inf)
    if Bp != B:
        x = jnp.pad(x, ((0, Bp - B), (0, 0)))  # zero rows, sliced off below

    inv_t = jnp.reshape(1.0 / jnp.asarray(temperature, dtype=jnp.float32), (1,))

    kernel = functools.partial(_gumbel_connector_kernel, hard=hard,
                               return_max_id=return_max_id)

    if return_max_id:
        out_shape = (
            jax.ShapeDtypeStruct((Bp, Cp), jnp.float32),
            jax.ShapeDtypeStruct((Bp, _LANES), jnp.int32),   # lane-dense idx
        )
        out_specs = (
            pl.BlockSpec((tb, Cp), lambda i: (i, 0)),
            pl.BlockSpec((tb, _LANES), lambda i: (i, 0)),
        )
    else:
        out_shape = jax.ShapeDtypeStruct((Bp, Cp), jnp.float32)
        out_specs = pl.BlockSpec((tb, Cp), lambda i: (i, 0))

    result = pl.pallas_call(
        kernel,
        out_shape=out_shape,
        grid=(Bp // tb,),
        in_specs=[
            pl.BlockSpec(memory_space=pltpu.MemorySpace.SMEM),   # 1/temperature
            pl.BlockSpec((tb, Cp), lambda i: (i, 0)),            # logits tile
        ],
        out_specs=out_specs,
        compiler_params=pltpu.CompilerParams(
            dimension_semantics=("parallel",),
            vmem_limit_bytes=vmem_limit),
    )(inv_t, x)

    # TODO(synk): vocab-scale C (100K+) should tile C on a second "arbitrary"
    # grid axis with an online max/sum; current kernel assumes a row fits VMEM.

    if return_max_id:
        y, idx = result
        return y[:B, :C], idx[:B, :1]
    return result[:B, :C]


def _reference_forward(logits, temperature=1.0, hard=False):
    """Plain-JAX reference for correctness checking."""
    y = jax.nn.softmax(logits.astype(jnp.float32) / temperature, axis=-1)
    idx = jnp.argmax(y, axis=1, keepdims=True)
    if hard:
        y = jax.nn.one_hot(idx[:, 0], logits.shape[-1], dtype=jnp.float32)
    return y, idx.astype(jnp.int32)


if __name__ == "__main__":
    key = jax.random.PRNGKey(0)

    # --- case 1: small [batch_size, n_class], lane-narrow C ---
    B, C = 8, 32
    logits = jax.random.normal(key, (B, C), dtype=jnp.float32)

    y_soft = gumbel_connector_forward(logits, temperature=1.0, hard=False)
    y_soft2, idx_soft = gumbel_connector_forward(
        logits, temperature=1.0, hard=False, return_max_id=True)
    y_hard, max_id = gumbel_connector_forward(
        logits, temperature=0.8, hard=True, return_max_id=True)
    jax.block_until_ready((y_soft, y_soft2, idx_soft, y_hard, max_id))

    ref_soft, ref_idx_soft = _reference_forward(logits, 1.0, hard=False)
    ref_hard, ref_idx_hard = _reference_forward(logits, 0.8, hard=True)

    assert jnp.allclose(y_soft, ref_soft, atol=1e-5, rtol=1e-5)
    assert jnp.allclose(y_soft2, ref_soft, atol=1e-5, rtol=1e-5)
    assert jnp.array_equal(idx_soft, ref_idx_soft)
    assert jnp.allclose(y_hard, ref_hard, atol=1e-5, rtol=1e-5)
    assert jnp.array_equal(max_id, ref_idx_hard)
    assert jnp.allclose(jnp.sum(y_soft, axis=-1), jnp.ones((B,)), atol=1e-5)

    # --- case 2: C >= 128 and not a multiple of 128 (exercises -inf pad,
    #     multi-step grid, lane-dense idx output) ---
    B2, C2 = 16, 160
    logits2 = jax.random.normal(jax.random.PRNGKey(1), (B2, C2),
                                dtype=jnp.float32)
    y2, idx2 = gumbel_connector_forward(
        logits2, temperature=1.3, hard=False, return_max_id=True)
    y2h, idx2h = gumbel_connector_forward(
        logits2, temperature=1.3, hard=True, return_max_id=True)
    jax.block_until_ready((y2, idx2, y2h, idx2h))

    ref2, ref_idx2 = _reference_forward(logits2, 1.3, hard=False)
    ref2h, _ = _reference_forward(logits2, 1.3, hard=True)

    assert jnp.allclose(y2, ref2, atol=1e-5, rtol=1e-5)
    assert jnp.array_equal(idx2, ref_idx2)
    assert jnp.allclose(y2h, ref2h, atol=1e-5, rtol=1e-5)
    assert jnp.array_equal(idx2h, ref_idx2)
    assert jnp.allclose(jnp.sum(y2, axis=-1), jnp.ones((B2,)), atol=1e-5)

    print("KERNEL_OK")
</pallas_src>

<mosaic_0001>
module attributes {stable_mosaic.version = 11 : i64} {
  func.func @_gumbel_connector_kernel(%arg0: i32, %arg1: memref<1xf32, #tpu.memory_space<smem>>, %arg2: memref<8x32xf32, #tpu.memory_space<vmem>>, %arg3: memref<8x32xf32, #tpu.memory_space<vmem>>) attributes {dimension_semantics = [#tpu.dimension_semantics<parallel>], iteration_bounds = array<i64: 1>, scalar_prefetch = 0 : i64, scratch_operands = 0 : i64, tpu.core_type = #tpu.core_type<tc>, window_params = [{transform_indices = @transform_0, window_bounds = array<i64: 1>}, {transform_indices = @transform_1, window_bounds = array<i64: 8, 32>}, {transform_indices = @transform_2, window_bounds = array<i64: 8, 32>}]} {
    %c0 = arith.constant 0 : index
    %c0_0 = arith.constant 0 : index
    %0 = vector.load %arg2[%c0, %c0_0] : memref<8x32xf32, #tpu.memory_space<vmem>>, vector<8x32xf32>
    %c0_1 = arith.constant 0 : index
    %1 = memref.load %arg1[%c0_1] : memref<1xf32, #tpu.memory_space<smem>>
    %2 = vector.broadcast %1 : f32 to vector<8x32xf32>
    %3 = arith.mulf %0, %2 : vector<8x32xf32>
    %cst = arith.constant dense<0xFF800000> : vector<8xf32>
    %4 = vector.multi_reduction <maximumf>, %3, %cst [1] : vector<8x32xf32> to vector<8xf32>
    %5 = vector.shape_cast %4 : vector<8xf32> to vector<8x1xf32>
    %6 = vector.broadcast %5 : vector<8x1xf32> to vector<8x32xf32>
    %7 = arith.subf %3, %6 : vector<8x32xf32>
    %8 = math.exp %7 : vector<8x32xf32>
    %cst_2 = arith.constant dense<0.000000e+00> : vector<8xf32>
    %9 = vector.multi_reduction <add>, %8, %cst_2 [1] : vector<8x32xf32> to vector<8xf32>
    %10 = vector.shape_cast %9 : vector<8xf32> to vector<8x1xf32>
    %11 = vector.broadcast %10 : vector<8x1xf32> to vector<8x32xf32>
    %12 = arith.divf %8, %11 : vector<8x32xf32>
    %c0_3 = arith.constant 0 : index
    %c0_4 = arith.constant 0 : index
    %13 = vector.load %arg3[%c0_3, %c0_4] : memref<8x32xf32, #tpu.memory_space<vmem>>, vector<8x32xf32>
    tpu.vector_store %arg3[%c0_3, %c0_4], %12 {strides = array<i32>} : memref<8x32xf32, #tpu.memory_space<vmem>>, vector<8x32xf32>,
    return
  }
  func.func @transform_0(%arg0: i32) -> i32 {
    %c0_i32 = arith.constant 0 : i32
    %c0_i32_0 = arith.constant 0 : i32
    return %c0_i32 : i32
  }
  func.func @transform_1(%arg0: i32) -> (i32, i32) {
    %c0_i32 = arith.constant 0 : i32
    %c0_i32_0 = arith.constant 0 : i32
    return %arg0, %c0_i32 : i32, i32
  }
  func.func @transform_2(%arg0: i32) -> (i32, i32) {
    %c0_i32 = arith.constant 0 : i32
    %c0_i32_0 = arith.constant 0 : i32
    return %arg0, %c0_i32 : i32, i32
  }
}

</mosaic_0001>

<llo_original>
// kernel: gumbel_connector_forward.1
$region0: #{gumbel_connector_forward.1}
  #allocation0 [shape = 'u32[]', space=smem, size = 0x4, offset = 0x4, fixed_abs, tag = 'smem constant byte address 0x4 - core index']
  #allocation1 [shape = 'u32[72,128]{1,0:T(1,128)}', space=vmem, size = 0x9000, scoped, tag = 'internal scratch']
  #allocation2 [shape = 'f32[1]{0:T(128)S(6)}', space=smem, size = 0x200, scoped, tag = 'scoped memory for gumbel_connector_forward.1']
  %s0 = inlined_call_operand.<no memory space> [shape: f32[1], index: 0, kind: input, shape index: {}]
  %s1 = inlined_call_operand.hbm [shape: f32[8,32], index: 1, kind: input, shape index: {}]
  %s2 = inlined_call_operand.hbm [shape: f32[8,32], index: 2, kind: output, shape index: {}]
  %s3 = sld [smem:[#allocation0]]
  $region22: #{gumbel_connector_forward.1} parent=0
    _
  %s5 = ssub.s32 1, %s3
  %s6 = scalar_select 0, %s5, %s3
  %7 = sst [smem:[#allocation2]] %s0
  $region1: #{gumbel_connector_forward.1} parent=0
    #allocation3 [shape = 'u8[4096]{0}', space=vmem, size = 0x1000, scoped, tag = 'input window, operand 1, single buffered']
    #allocation4 [shape = 's32[1]{0}', space=sflag, size = 0x4, scoped, tag = 'scoped memory for gumbel_connector_forward.1']
    #allocation5 [shape = 's32[1]{0}', space=sflag, size = 0x4, scoped, tag = 'scoped memory for gumbel_connector_forward.1']
    #allocation6 [shape = 'u8[4096]{0}', space=vmem, size = 0x1000, scoped, tag = 'output window, operand 0, single buffered']
    %8 = vsyncpa [#allocation4], 0
    %9 = vsyncpa [#allocation5], 0
    // Predicated region
    $region2: #{gumbel_connector_forward.1} parent=1 // pred_check
      _
    $region3: #{gumbel_connector_forward.1} parent=1 // pred_check_branch
      %11 = sbr.rel (0) target = $region5
    $region4: #{gumbel_connector_forward.1} parent=1 // pred_region
      _
    $region5: #{gumbel_connector_forward.1} parent=1 // pred_fallthru
      _
    // Predicated region
    $region6: #{gumbel_connector_forward.1} parent=1 // pred_check
      _
    $region7: #{gumbel_connector_forward.1} parent=1 // pred_check_branch
      %13 = sbr.rel (0) target = $region9
    $region8: #{gumbel_connector_forward.1} parent=1 // pred_region
      %15 = vsyncadd [#allocation4], 0
      %s17 = sshll.u32 %s1, 4
      %s18 = int_to_ptr.hbm [resolvable:$true] %s17
      %s19 = sshll.u32 [#allocation3], 4
      %s20 = int_to_ptr.vmem [resolvable:$true] %s19
      %22 = dma.hbm_to_vmem [thread:$0]  %s18, 128, %s20, [#allocation4]
    $region9: #{gumbel_connector_forward.1} parent=1 // pred_fallthru
      _
    // Predicated region
    $region10: #{gumbel_connector_forward.1} parent=1 // pred_check
      _
    $region11: #{gumbel_connector_forward.1} parent=1 // pred_check_branch
      %24 = sbr.rel (0) target = $region13
    $region12: #{gumbel_connector_forward.1} parent=1 // pred_region
      %26 = dma.done [#allocation4], 128
    $region13: #{gumbel_connector_forward.1} parent=1 // pred_fallthru
      _
    %v27 = vld [vmem:[#allocation3] sm:$0xff]
    %s28 = sld [smem:[#allocation2]]
    %v29 = vstv %s28
    %v30 = vmul.f32 %v27, %v29
    %vm31 = vcmask 261120
    %v32 = vsel %vm31, %v30, -inf
    %33 = vmax.xlane.f32.xlu0 %v32
    %v34 = vpop.xlane.xlu0 %33
    %v35 = vsub.f32 %v30, %v34
    %v36 = vmul.f32 %v35, 1.442695
    %v37 = vpow.pop %v36
    %v38 = vsel %vm31, %v37, 0.0
    %39 = vadd.xlane.f32.xlu0 %v38
    %v40 = vpop.xlane.xlu0 %39
    %v41 = vrcp.pop %v40
    %v42 = vmul.f32 %v40, %v41
    %v43 = vsub.f32 1.0, %v42
    %v44 = vmul.f32 %v41, %v43
    %v45 = vadd.f32 %v41, %v44
    %vm46 = vweird.f32 %v40
    %vm47 = vweird.f32 %v41
    %vm48 = vmor %vm46, %vm47
    %v49 = vsel %vm48, %v41, %v45
    %v50 = vand.u32 2147483647, %v40
    %vm51 = vcmp.eq.f32.partialorder %v50, 8.507059e+37
    %v52 = vand.u32 %v40, 2147483648
    %v53 = vor.u32 1.1754944e-38, %v52
    %v54 = vsel %vm51, %v53, %v49
    %v55 = vmul.f32 %v37, %v54
    %56 = vst.msk [vmem:[#allocation6] sm:$0xff] %vm31, %v55
    // Predicated region
    $region14: #{gumbel_connector_forward.1} parent=1 // pred_check
      _
    $region15: #{gumbel_connector_forward.1} parent=1 // pred_check_branch
      %58 = sbr.rel (0) target = $region17
    $region16: #{gumbel_connector_forward.1} parent=1 // pred_region
      %60 = vsyncadd [#allocation5], 0
      %s62 = sshll.u32 [#allocation6], 4
      %s63 = int_to_ptr.vmem [resolvable:$true] %s62
      %s64 = sshll.u32 %s2, 4
      %s65 = int_to_ptr.hbm [resolvable:$true] %s64
      %67 = dma.vmem_to_hbm [thread:$0]  %s63, 128, %s65, [#allocation5]
    $region17: #{gumbel_connector_forward.1} parent=1 // pred_fallthru
      _
    // Predicated region
    $region18: #{gumbel_connector_forward.1} parent=1 // pred_check
      _
    $region19: #{gumbel_connector_forward.1} parent=1 // pred_check_branch
      %69 = sbr.rel (0) target = $region21
    $region20: #{gumbel_connector_forward.1} parent=1 // pred_region
      %71 = dma.done [#allocation5], 128
    $region21: #{gumbel_connector_forward.1} parent=1 // pred_fallthru
      _
    %72 = vsyncpa [#allocation4], 1
    %73 = vsyncpa [#allocation5], 1

</llo_original>
